<compile_context>
chip_gen: v5e
topology: v5e:2x2
jax: 0.10.0
libtpu: 0.0.40
codegen_flags: <defaults>
</compile_context>

<pallas_src>
import functools

import jax
import jax.numpy as jnp
from jax.experimental import pallas as pl
from jax.experimental.pallas import tpu as pltpu


def _flash_attn_fcout_kernel(q_ref, k_ref, v_ref, woth_ref, bo_ref,
                             o_ref,
                             m_sc, l_sc, acc_sc,
                             *, mxu_dtype, approx_reciprocal, exp_dtype):
    # q_ref          : (1, H, tq, D)  projected (and pre-scaled) q tile, mxu_dtype
    # k_ref / v_ref  : (1, H, tk, D)  projected k/v tile, mxu_dtype
    # woth_ref       : (H, D, E)      fc_out weight, pre-transposed & head-split
    # bo_ref         : (1, E)         fc_out bias (f32)
    # o_ref          : (1, tq, E)     lane-dense output tile
    # scratch        : m_sc/l_sc (H,tq,1) f32, acc_sc (H,tq,D) f32
    H, tq, D = acc_sc.shape
    E = o_ref.shape[2]

    ki = pl.program_id(2)

    @pl.when(ki == 0)
    def _init():
        m_sc[...] = jnp.full(m_sc.shape, -jnp.inf, dtype=jnp.float32)
        l_sc[...] = jnp.zeros(l_sc.shape, dtype=jnp.float32)
        acc_sc[...] = jnp.zeros(acc_sc.shape, dtype=jnp.float32)

    q = q_ref[0]          # (H, tq, D), already projected + 1/sqrt(E) scaled
    k = k_ref[0]          # (H, tk, D), already projected
    v = v_ref[0]          # (H, tk, D), already projected

    # Energy for this (q-tile, k-tile): (H, tq, tk), f32 MXU accumulation.
    s = jnp.einsum('hqd,hkd->hqk', q, k, preferred_element_type=jnp.float32)
    # TODO(synk): optional mask would be applied to `s` here.

    # Online softmax update (elementwise math in f32; exp optionally bf16 on
    # v6e/v7x via exp_dtype -- never on v5e).
    m_prev = m_sc[...]
    m_new = jnp.maximum(m_prev, jnp.max(s, axis=-1, keepdims=True))
    alpha = jnp.exp(m_prev - m_new)
    p = jnp.exp((s - m_new).astype(exp_dtype))
    l_sc[...] = alpha * l_sc[...] + jnp.sum(
        p.astype(jnp.float32), axis=-1, keepdims=True)
    acc_sc[...] = alpha * acc_sc[...] + jnp.einsum(
        'hqk,hkd->hqd', p.astype(mxu_dtype), v,
        preferred_element_type=jnp.float32)
    m_sc[...] = m_new

    @pl.when(ki == pl.num_programs(2) - 1)
    def _finalize():
        # Deferred normalization: scale the (H, tq, D) accumulator by 1/l
        # (EUP reciprocal) instead of dividing the (tq, tk) prob matrix.
        r = pl.reciprocal(l_sc[...], approx=approx_reciprocal)   # (H, tq, 1)
        o = (acc_sc[...] * r).astype(mxu_dtype)                  # (H, tq, D)
        # Head-batched fc_out on the MXU accumulator path: sum_h o_h @ W_h.
        # No lane-slice staging stores, no (tq, E) scratch.
        out = jnp.zeros((tq, E), dtype=jnp.float32)
        for h in range(H):
            out = out + jnp.dot(o[h], woth_ref[h],
                                preferred_element_type=jnp.float32)
        o_ref[0] = (out + bo_ref[...]).astype(o_ref.dtype)


def _pick_tile(L, preferred=256):
    """Largest standard tile that divides L (whole sequence when small)."""
    if L <= preferred:
        return L
    for t in (preferred, 128, 64, 32, 16, 8):
        if L % t == 0:
            return t
    return L


def self_attention(values, keys, queries, params, heads, *,
                   q_tile=None, k_tile=None,
                   mxu_dtype=jnp.bfloat16, approx_reciprocal=True,
                   exp_dtype=jnp.float32,
                   vmem_limit_bytes=64 * 1024 * 1024):
    """values/keys: (N, Lk, E), queries: (N, Lq, E) float32 -> (N, Lq, E).

    Matches SelfAttention.forward with mask=None.
    """
    wq, wk, wv, wo, bo = params
    N, Lq, E = queries.shape
    Lk = keys.shape[1]
    if values.shape[1] != Lk:
        raise ValueError("values and keys must share a sequence length")
    H = heads
    D = E // H
    if D * H != E:
        raise ValueError(f"embed size {E} not divisible by heads {H}")

    # Sequence tiles (multiple of the 8-sublane granule; 256 default feeds the
    # 256-wide MXU on v6e/v7x -- drop to 128 on v5e or if VMEM-tight on v7x).
    if q_tile is None:
        q_tile = _pick_tile(Lq)
    if k_tile is None:
        k_tile = _pick_tile(Lk)
    assert Lq % q_tile == 0 and Lk % k_tile == 0

    # --- Fused wrapper pre-pass: ONE XLA op per tensor ------------------------
    # head split + head-shared nn.Linear projection (x @ W.T) + transpose to
    # (N, H, L, D) + cast to mxu_dtype.  The 1/sqrt(embed_size) softmax scale
    # is folded into the q projection.  This removes the per-(q-tile) K/V
    # re-projection and halves HBM->VMEM traffic for the streamed tiles.
    scale = 1.0 / (float(E) ** 0.5)
    qp = jnp.einsum('nlhd,ed->nhle',
                    queries.reshape(N, Lq, H, D), wq * scale).astype(mxu_dtype)
    kp = jnp.einsum('nlhd,ed->nhle',
                    keys.reshape(N, Lk, H, D), wk).astype(mxu_dtype)
    vp = jnp.einsum('nlhd,ed->nhle',
                    values.reshape(N, Lk, H, D), wv).astype(mxu_dtype)

    # fc_out computes x @ wo.T + bo with x = concat_h(o_h); pre-transpose and
    # head-split the weight so the kernel does sum_h o_h @ woth[h].
    woth = wo.T.reshape(H, D, E).astype(mxu_dtype)
    bo2 = bo.reshape(1, E).astype(jnp.float32)

    grid = (N, Lq // q_tile, Lk // k_tile)

    q_spec = pl.BlockSpec((1, H, q_tile, D), lambda n, qi, ki: (n, 0, qi, 0))
    k_spec = pl.BlockSpec((1, H, k_tile, D), lambda n, qi, ki: (n, 0, ki, 0))
    v_spec = pl.BlockSpec((1, H, k_tile, D), lambda n, qi, ki: (n, 0, ki, 0))
    wo_spec = pl.BlockSpec((H, D, E), lambda n, qi, ki: (0, 0, 0))
    bo_spec = pl.BlockSpec((1, E), lambda n, qi, ki: (0, 0))
    out_spec = pl.BlockSpec((1, q_tile, E), lambda n, qi, ki: (n, qi, 0))

    kernel = functools.partial(_flash_attn_fcout_kernel,
                               mxu_dtype=mxu_dtype,
                               approx_reciprocal=approx_reciprocal,
                               exp_dtype=exp_dtype)

    return pl.pallas_call(
        kernel,
        out_shape=jax.ShapeDtypeStruct((N, Lq, E), queries.dtype),
        grid_spec=pltpu.PrefetchScalarGridSpec(
            num_scalar_prefetch=0,
            grid=grid,
            in_specs=[q_spec, k_spec, v_spec, wo_spec, bo_spec],
            out_specs=out_spec,
            scratch_shapes=[
                pltpu.VMEM((H, q_tile, 1), jnp.float32),   # running max
                pltpu.VMEM((H, q_tile, 1), jnp.float32),   # running sum
                pltpu.VMEM((H, q_tile, D), jnp.float32),   # output accumulator
            ]),
        compiler_params=pltpu.CompilerParams(
            # N and Lq/q_tile are the megacore / v7x 2-TC sharding axes; keep
            # their combined extent >= 2 and balanced on v7x.
            dimension_semantics=("parallel", "parallel", "arbitrary"),
            vmem_limit_bytes=vmem_limit_bytes),
    )(qp, kp, vp, woth, bo2)


def reference_self_attention(values, keys, queries, params, heads):
    """Pure-JAX reference mirroring the PyTorch forward (mask=None)."""
    wq, wk, wv, wo, bo = params
    N, Lq, E = queries.shape
    Lk = keys.shape[1]
    D = E // heads
    v = values.reshape(N, Lk, heads, D)
    k = keys.reshape(N, Lk, heads, D)
    q = queries.reshape(N, Lq, heads, D)
    v = jnp.einsum('nlhd,ed->nlhe', v, wv)
    k = jnp.einsum('nlhd,ed->nlhe', k, wk)
    q = jnp.einsum('nlhd,ed->nlhe', q, wq)
    energy = jnp.einsum('nqhd,nkhd->nhqk', q, k)
    attn = jax.nn.softmax(energy / (E ** 0.5), axis=3)
    out = jnp.einsum('nhqk,nkhd->nqhd', attn, v).reshape(N, Lq, E)
    return jnp.einsum('nle,fe->nlf', out, wo) + bo


if __name__ == "__main__":
    heads = 4
    E = 32
    D = E // heads

    key = jax.random.PRNGKey(0)
    kwq, kwk, kwv, kwo, kbo, kdat_a, kdat_b = jax.random.split(key, 7)

    # Deterministic parameters (shapes from the module's __init__).
    wq = jax.random.normal(kwq, (D, D), dtype=jnp.float32) * 0.2
    wk = jax.random.normal(kwk, (D, D), dtype=jnp.float32) * 0.2
    wv = jax.random.normal(kwv, (D, D), dtype=jnp.float32) * 0.2
    wo = jax.random.normal(kwo, (E, E), dtype=jnp.float32) * 0.1
    bo = jax.random.normal(kbo, (E,), dtype=jnp.float32) * 0.1
    params = (wq, wk, wv, wo, bo)

    # --- Case A: Lq != Lk, single k tile --------------------------------------
    N, Lq, Lk = 2, 8, 16
    ka_v, ka_k, ka_q = jax.random.split(kdat_a, 3)
    values_a = jax.random.normal(ka_v, (N, Lk, E), dtype=jnp.float32)
    keys_a = jax.random.normal(ka_k, (N, Lk, E), dtype=jnp.float32)
    queries_a = jax.random.normal(ka_q, (N, Lq, E), dtype=jnp.float32)
    ref_a = jax.block_until_ready(
        reference_self_attention(values_a, keys_a, queries_a, params, heads))

    # bf16 MXU operands / f32 accumulation (default perf path).
    out_a = jax.block_until_ready(
        self_attention(values_a, keys_a, queries_a, params, heads))
    assert out_a.shape == (N, Lq, E)
    assert jnp.allclose(out_a, ref_a, atol=5e-2, rtol=5e-2), "bf16 path mismatch"

    # Full-precision path (f32 operands, exact reciprocal) -- tight check.
    out_a32 = jax.block_until_ready(
        self_attention(values_a, keys_a, queries_a, params, heads,
                       mxu_dtype=jnp.float32, approx_reciprocal=False))
    assert jnp.allclose(out_a32, ref_a, atol=2e-4, rtol=2e-4), "f32 path mismatch"

    # --- Case B: multiple q and k tiles exercise the online-softmax path ------
    N, Lq, Lk = 2, 16, 16
    kb_v, kb_k, kb_q = jax.random.split(kdat_b, 3)
    values_b = jax.random.normal(kb_v, (N, Lk, E), dtype=jnp.float32)
    keys_b = jax.random.normal(kb_k, (N, Lk, E), dtype=jnp.float32)
    queries_b = jax.random.normal(kb_q, (N, Lq, E), dtype=jnp.float32)
    ref_b = reference_self_attention(values_b, keys_b, queries_b, params, heads)

    out_b = jax.block_until_ready(
        self_attention(values_b, keys_b, queries_b, params, heads,
                       q_tile=8, k_tile=8))          # grid (2, 2, 2)
    assert out_b.shape == (N, Lq, E)
    assert jnp.allclose(out_b, ref_b, atol=5e-2, rtol=5e-2), "tiled path mismatch"

    print("KERNEL_OK")
</pallas_src>

<mosaic_0001>
module attributes {stable_mosaic.version = 11 : i64} {
  func.func @_flash_attn_fcout_kernel(%arg0: i32, %arg1: i32, %arg2: i32, %arg3: memref<1x4x8x8xbf16, #tpu.memory_space<vmem>>, %arg4: memref<1x4x16x8xbf16, #tpu.memory_space<vmem>>, %arg5: memref<1x4x16x8xbf16, #tpu.memory_space<vmem>>, %arg6: memref<4x8x32xbf16, #tpu.memory_space<vmem>>, %arg7: memref<1x32xf32, #tpu.memory_space<vmem>>, %arg8: memref<1x8x32xf32, #tpu.memory_space<vmem>>, %arg9: memref<4x8x1xf32, #tpu.memory_space<vmem>>, %arg10: memref<4x8x1xf32, #tpu.memory_space<vmem>>, %arg11: memref<4x8x8xf32, #tpu.memory_space<vmem>>) attributes {dimension_semantics = [#tpu.dimension_semantics<parallel>, #tpu.dimension_semantics<parallel>, #tpu.dimension_semantics<arbitrary>], iteration_bounds = array<i64: 2, 1, 1>, scalar_prefetch = 0 : i64, scratch_operands = 3 : i64, tpu.core_type = #tpu.core_type<tc>, window_params = [{transform_indices = @transform_0, window_bounds = array<i64: 1, 4, 8, 8>}, {transform_indices = @transform_1, window_bounds = array<i64: 1, 4, 16, 8>}, {transform_indices = @transform_2, window_bounds = array<i64: 1, 4, 16, 8>}, {pipeline_mode = #tpu.pipeline_mode<synchronous>, transform_indices = @transform_3, window_bounds = array<i64: 4, 8, 32>}, {pipeline_mode = #tpu.pipeline_mode<synchronous>, transform_indices = @transform_4, window_bounds = array<i64: 1, 32>}, {transform_indices = @transform_5, window_bounds = array<i64: 1, 8, 32>}]} {
    %c0_i32 = arith.constant 0 : i32
    %0 = arith.cmpi eq, %arg2, %c0_i32 : i32
    %1 = arith.extui %0 : i1 to i32
    %c0_i32_0 = arith.constant 0 : i32
    %2 = arith.cmpi ne, %1, %c0_i32_0 : i32
    scf.if %2 {
      %cst_35 = arith.constant 0xFF800000 : f32
      %36 = vector.broadcast %cst_35 : f32 to vector<4x8x1xf32>
      %c0_36 = arith.constant 0 : index
      %c0_37 = arith.constant 0 : index
      %c0_38 = arith.constant 0 : index
      %37 = vector.load %arg9[%c0_36, %c0_37, %c0_38] : memref<4x8x1xf32, #tpu.memory_space<vmem>>, vector<4x8x1xf32>
      tpu.vector_store %arg9[%c0_36, %c0_37, %c0_38], %36 {strides = array<i32>} : memref<4x8x1xf32, #tpu.memory_space<vmem>>, vector<4x8x1xf32>,
      %cst_39 = arith.constant 0.000000e+00 : f32
      %38 = vector.broadcast %cst_39 : f32 to vector<4x8x1xf32>
      %c0_40 = arith.constant 0 : index
      %c0_41 = arith.constant 0 : index
      %c0_42 = arith.constant 0 : index
      %39 = vector.load %arg10[%c0_40, %c0_41, %c0_42] : memref<4x8x1xf32, #tpu.memory_space<vmem>>, vector<4x8x1xf32>
      tpu.vector_store %arg10[%c0_40, %c0_41, %c0_42], %38 {strides = array<i32>} : memref<4x8x1xf32, #tpu.memory_space<vmem>>, vector<4x8x1xf32>,
      %cst_43 = arith.constant 0.000000e+00 : f32
      %40 = vector.broadcast %cst_43 : f32 to vector<4x8x8xf32>
      %c0_44 = arith.constant 0 : index
      %c0_45 = arith.constant 0 : index
      %c0_46 = arith.constant 0 : index
      %41 = vector.load %arg11[%c0_44, %c0_45, %c0_46] : memref<4x8x8xf32, #tpu.memory_space<vmem>>, vector<4x8x8xf32>
      tpu.vector_store %arg11[%c0_44, %c0_45, %c0_46], %40 {strides = array<i32>} : memref<4x8x8xf32, #tpu.memory_space<vmem>>, vector<4x8x8xf32>,
    } else {
    }
    %c0 = arith.constant 0 : index
    %c0_1 = arith.constant 0 : index
    %c0_2 = arith.constant 0 : index
    %c0_3 = arith.constant 0 : index
    %3 = vector.load %arg3[%c0, %c0_1, %c0_2, %c0_3] : memref<1x4x8x8xbf16, #tpu.memory_space<vmem>>, vector<1x4x8x8xbf16>
    %4 = vector.shape_cast %3 : vector<1x4x8x8xbf16> to vector<4x8x8xbf16>
    %c0_4 = arith.constant 0 : index
    %c0_5 = arith.constant 0 : index
    %c0_6 = arith.constant 0 : index
    %c0_7 = arith.constant 0 : index
    %5 = vector.load %arg4[%c0_4, %c0_5, %c0_6, %c0_7] : memref<1x4x16x8xbf16, #tpu.memory_space<vmem>>, vector<1x4x16x8xbf16>
    %6 = vector.shape_cast %5 : vector<1x4x16x8xbf16> to vector<4x16x8xbf16>
    %c0_8 = arith.constant 0 : index
    %c0_9 = arith.constant 0 : index
    %c0_10 = arith.constant 0 : index
    %c0_11 = arith.constant 0 : index
    %7 = vector.load %arg5[%c0_8, %c0_9, %c0_10, %c0_11] : memref<1x4x16x8xbf16, #tpu.memory_space<vmem>>, vector<1x4x16x8xbf16>
    %8 = vector.shape_cast %7 : vector<1x4x16x8xbf16> to vector<4x16x8xbf16>
    "tpu.trace_start"() <{level = 10 : i32, message = "hqd,hkd->hqk"}> : () -> ()
    %cst = arith.constant dense<0.000000e+00> : vector<4x8x16xf32>
    %9 = tpu.matmul %4, %6, %cst {dimension_numbers = #tpu.dot_dimension_numbers<[2], [2], [1], [1], [0, 0, 0, 1, 1, 1], [0], [0]>} : vector<4x8x8xbf16>, vector<4x16x8xbf16>, vector<4x8x16xf32> -> vector<4x8x16xf32>
    "tpu.trace_stop"() : () -> ()
    %c0_12 = arith.constant 0 : index
    %c0_13 = arith.constant 0 : index
    %c0_14 = arith.constant 0 : index
    %10 = vector.load %arg9[%c0_12, %c0_13, %c0_14] : memref<4x8x1xf32, #tpu.memory_space<vmem>>, vector<4x8x1xf32>
    %cst_15 = arith.constant dense<0xFF800000> : vector<4x8xf32>
    %11 = vector.multi_reduction <maximumf>, %9, %cst_15 [2] : vector<4x8x16xf32> to vector<4x8xf32>
    %12 = vector.shape_cast %11 : vector<4x8xf32> to vector<4x8x1xf32>
    %13 = arith.maximumf %10, %12 : vector<4x8x1xf32>
    %14 = arith.subf %10, %13 : vector<4x8x1xf32>
    %15 = math.exp %14 : vector<4x8x1xf32>
    %16 = vector.broadcast %13 : vector<4x8x1xf32> to vector<4x8x16xf32>
    %17 = arith.subf %9, %16 : vector<4x8x16xf32>
    %18 = math.exp %17 : vector<4x8x16xf32>
    %c0_16 = arith.constant 0 : index
    %c0_17 = arith.constant 0 : index
    %c0_18 = arith.constant 0 : index
    %19 = vector.load %arg10[%c0_16, %c0_17, %c0_18] : memref<4x8x1xf32, #tpu.memory_space<vmem>>, vector<4x8x1xf32>
    %20 = arith.mulf %15, %19 : vector<4x8x1xf32>
    %cst_19 = arith.constant dense<0.000000e+00> : vector<4x8xf32>
    %21 = vector.multi_reduction <add>, %18, %cst_19 [2] : vector<4x8x16xf32> to vector<4x8xf32>
    %22 = vector.shape_cast %21 : vector<4x8xf32> to vector<4x8x1xf32>
    %23 = arith.addf %20, %22 : vector<4x8x1xf32>
    %c0_20 = arith.constant 0 : index
    %c0_21 = arith.constant 0 : index
    %c0_22 = arith.constant 0 : index
    %24 = vector.load %arg10[%c0_20, %c0_21, %c0_22] : memref<4x8x1xf32, #tpu.memory_space<vmem>>, vector<4x8x1xf32>
    tpu.vector_store %arg10[%c0_20, %c0_21, %c0_22], %23 {strides = array<i32>} : memref<4x8x1xf32, #tpu.memory_space<vmem>>, vector<4x8x1xf32>,
    %c0_23 = arith.constant 0 : index
    %c0_24 = arith.constant 0 : index
    %c0_25 = arith.constant 0 : index
    %25 = vector.load %arg11[%c0_23, %c0_24, %c0_25] : memref<4x8x8xf32, #tpu.memory_space<vmem>>, vector<4x8x8xf32>
    %26 = vector.broadcast %15 : vector<4x8x1xf32> to vector<4x8x8xf32>
    %27 = arith.mulf %26, %25 : vector<4x8x8xf32>
    %28 = arith.truncf %18 : vector<4x8x16xf32> to vector<4x8x16xbf16>
    "tpu.trace_start"() <{level = 10 : i32, message = "hqk,hkd->hqd"}> : () -> ()
    %cst_26 = arith.constant dense<0.000000e+00> : vector<4x8x8xf32>
    %29 = tpu.matmul %28, %8, %cst_26 {dimension_numbers = #tpu.dot_dimension_numbers<[2], [1], [1], [2], [0, 0, 0, 1, 1, 2], [0], [0]>} : vector<4x8x16xbf16>, vector<4x16x8xbf16>, vector<4x8x8xf32> -> vector<4x8x8xf32>
    "tpu.trace_stop"() : () -> ()
    %30 = arith.addf %27, %29 : vector<4x8x8xf32>
    %c0_27 = arith.constant 0 : index
    %c0_28 = arith.constant 0 : index
    %c0_29 = arith.constant 0 : index
    %31 = vector.load %arg11[%c0_27, %c0_28, %c0_29] : memref<4x8x8xf32, #tpu.memory_space<vmem>>, vector<4x8x8xf32>
    tpu.vector_store %arg11[%c0_27, %c0_28, %c0_29], %30 {strides = array<i32>} : memref<4x8x8xf32, #tpu.memory_space<vmem>>, vector<4x8x8xf32>,
    %c0_30 = arith.constant 0 : index
    %c0_31 = arith.constant 0 : index
    %c0_32 = arith.constant 0 : index
    %32 = vector.load %arg9[%c0_30, %c0_31, %c0_32] : memref<4x8x1xf32, #tpu.memory_space<vmem>>, vector<4x8x1xf32>
    tpu.vector_store %arg9[%c0_30, %c0_31, %c0_32], %13 {strides = array<i32>} : memref<4x8x1xf32, #tpu.memory_space<vmem>>, vector<4x8x1xf32>,
    %c0_i32_33 = arith.constant 0 : i32
    %33 = arith.cmpi eq, %arg2, %c0_i32_33 : i32
    %34 = arith.extui %33 : i1 to i32
    %c0_i32_34 = arith.constant 0 : i32
    %35 = arith.cmpi ne, %34, %c0_i32_34 : i32
    scf.if %35 {
      %c0_35 = arith.constant 0 : index
      %c0_36 = arith.constant 0 : index
      %c0_37 = arith.constant 0 : index
      %36 = vector.load %arg10[%c0_35, %c0_36, %c0_37] : memref<4x8x1xf32, #tpu.memory_space<vmem>>, vector<4x8x1xf32>
      %37 = tpu.reciprocal %36 {approx = true} : vector<4x8x1xf32> -> vector<4x8x1xf32>
      %c0_38 = arith.constant 0 : index
      %c0_39 = arith.constant 0 : index
      %c0_40 = arith.constant 0 : index
      %38 = vector.load %arg11[%c0_38, %c0_39, %c0_40] : memref<4x8x8xf32, #tpu.memory_space<vmem>>, vector<4x8x8xf32>
      %39 = vector.broadcast %37 : vector<4x8x1xf32> to vector<4x8x8xf32>
      %40 = arith.mulf %38, %39 : vector<4x8x8xf32>
      %41 = arith.truncf %40 : vector<4x8x8xf32> to vector<4x8x8xbf16>
      %cst_41 = arith.constant 0.000000e+00 : f32
      %42 = vector.broadcast %cst_41 : f32 to vector<8x32xf32>
      %43 = vector.extract_strided_slice %41 {offsets = [0, 0, 0], sizes = [1, 8, 8], strides = [1, 1, 1]} : vector<4x8x8xbf16> to vector<1x8x8xbf16>
      %44 = vector.shape_cast %43 : vector<1x8x8xbf16> to vector<8x8xbf16>
      %c0_42 = arith.constant 0 : index
      %c0_43 = arith.constant 0 : index
      %c0_44 = arith.constant 0 : index
      %45 = vector.load %arg6[%c0_42, %c0_43, %c0_44] : memref<4x8x32xbf16, #tpu.memory_space<vmem>>, vector<1x8x32xbf16>
      %46 = vector.shape_cast %45 : vector<1x8x32xbf16> to vector<8x32xbf16>
      %cst_45 = arith.constant dense<0.000000e+00> : vector<8x32xf32>
      %47 = tpu.matmul %44, %46, %cst_45 {dimension_numbers = #tpu.dot_dimension_numbers<[1], [0], [0], [1], [0, 0, 1, 1], [], []>} : vector<8x8xbf16>, vector<8x32xbf16>, vector<8x32xf32> -> vector<8x32xf32>
      %48 = arith.addf %42, %47 : vector<8x32xf32>
      %49 = vector.extract_strided_slice %41 {offsets = [1, 0, 0], sizes = [1, 8, 8], strides = [1, 1, 1]} : vector<4x8x8xbf16> to vector<1x8x8xbf16>
      %50 = vector.shape_cast %49 : vector<1x8x8xbf16> to vector<8x8xbf16>
      %c1 = arith.constant 1 : index
      %c0_46 = arith.constant 0 : index
      %c0_47 = arith.constant 0 : index
      %51 = vector.load %arg6[%c1, %c0_46, %c0_47] : memref<4x8x32xbf16, #tpu.memory_space<vmem>>, vector<1x8x32xbf16>
      %52 = vector.shape_cast %51 : vector<1x8x32xbf16> to vector<8x32xbf16>
      %cst_48 = arith.constant dense<0.000000e+00> : vector<8x32xf32>
      %53 = tpu.matmul %50, %52, %cst_48 {dimension_numbers = #tpu.dot_dimension_numbers<[1], [0], [0], [1], [0, 0, 1, 1], [], []>} : vector<8x8xbf16>, vector<8x32xbf16>, vector<8x32xf32> -> vector<8x32xf32>
      %54 = arith.addf %48, %53 : vector<8x32xf32>
      %55 = vector.extract_strided_slice %41 {offsets = [2, 0, 0], sizes = [1, 8, 8], strides = [1, 1, 1]} : vector<4x8x8xbf16> to vector<1x8x8xbf16>
      %56 = vector.shape_cast %55 : vector<1x8x8xbf16> to vector<8x8xbf16>
      %c2 = arith.constant 2 : index
      %c0_49 = arith.constant 0 : index
      %c0_50 = arith.constant 0 : index
      %57 = vector.load %arg6[%c2, %c0_49, %c0_50] : memref<4x8x32xbf16, #tpu.memory_space<vmem>>, vector<1x8x32xbf16>
      %58 = vector.shape_cast %57 : vector<1x8x32xbf16> to vector<8x32xbf16>
      %cst_51 = arith.constant dense<0.000000e+00> : vector<8x32xf32>
      %59 = tpu.matmul %56, %58, %cst_51 {dimension_numbers = #tpu.dot_dimension_numbers<[1], [0], [0], [1], [0, 0, 1, 1], [], []>} : vector<8x8xbf16>, vector<8x32xbf16>, vector<8x32xf32> -> vector<8x32xf32>
      %60 = arith.addf %54, %59 : vector<8x32xf32>
      %61 = vector.extract_strided_slice %41 {offsets = [3, 0, 0], sizes = [1, 8, 8], strides = [1, 1, 1]} : vector<4x8x8xbf16> to vector<1x8x8xbf16>
      %62 = vector.shape_cast %61 : vector<1x8x8xbf16> to vector<8x8xbf16>
      %c3 = arith.constant 3 : index
      %c0_52 = arith.constant 0 : index
      %c0_53 = arith.constant 0 : index
      %63 = vector.load %arg6[%c3, %c0_52, %c0_53] : memref<4x8x32xbf16, #tpu.memory_space<vmem>>, vector<1x8x32xbf16>
      %64 = vector.shape_cast %63 : vector<1x8x32xbf16> to vector<8x32xbf16>
      %cst_54 = arith.constant dense<0.000000e+00> : vector<8x32xf32>
      %65 = tpu.matmul %62, %64, %cst_54 {dimension_numbers = #tpu.dot_dimension_numbers<[1], [0], [0], [1], [0, 0, 1, 1], [], []>} : vector<8x8xbf16>, vector<8x32xbf16>, vector<8x32xf32> -> vector<8x32xf32>
      %66 = arith.addf %60, %65 : vector<8x32xf32>
      %c0_55 = arith.constant 0 : index
      %c0_56 = arith.constant 0 : index
      %67 = vector.load %arg7[%c0_55, %c0_56] : memref<1x32xf32, #tpu.memory_space<vmem>>, vector<1x32xf32>
      %68 = vector.broadcast %67 : vector<1x32xf32> to vector<8x32xf32>
      %69 = arith.addf %66, %68 : vector<8x32xf32>
      %c0_57 = arith.constant 0 : index
      %c0_58 = arith.constant 0 : index
      %c0_59 = arith.constant 0 : index
      %70 = vector.load %arg8[%c0_57, %c0_58, %c0_59] : memref<1x8x32xf32, #tpu.memory_space<vmem>>, vector<1x8x32xf32>
      %71 = vector.shape_cast %70 : vector<1x8x32xf32> to vector<8x32xf32>
      %72 = vector.shape_cast %69 : vector<8x32xf32> to vector<1x8x32xf32>
      tpu.vector_store %arg8[%c0_57, %c0_58, %c0_59], %72 {strides = array<i32>} : memref<1x8x32xf32, #tpu.memory_space<vmem>>, vector<1x8x32xf32>,
    } else {
    }
    return
  }
  func.func @transform_0(%arg0: i32, %arg1: i32, %arg2: i32) -> (i32, i32, i32, i32) {
    %c0_i32 = arith.constant 0 : i32
    %c0_i32_0 = arith.constant 0 : i32
    %c0_i32_1 = arith.constant 0 : i32
    return %arg0, %c0_i32, %arg1, %c0_i32_0 : i32, i32, i32, i32
  }
  func.func @transform_1(%arg0: i32, %arg1: i32, %arg2: i32) -> (i32, i32, i32, i32) {
    %c0_i32 = arith.constant 0 : i32
    %c0_i32_0 = arith.constant 0 : i32
    %c0_i32_1 = arith.constant 0 : i32
    return %arg0, %c0_i32, %arg2, %c0_i32_0 : i32, i32, i32, i32
  }
  func.func @transform_2(%arg0: i32, %arg1: i32, %arg2: i32) -> (i32, i32, i32, i32) {
    %c0_i32 = arith.constant 0 : i32
    %c0_i32_0 = arith.constant 0 : i32
    %c0_i32_1 = arith.constant 0 : i32
    return %arg0, %c0_i32, %arg2, %c0_i32_0 : i32, i32, i32, i32
  }
  func.func @transform_3(%arg0: i32, %arg1: i32, %arg2: i32) -> (i32, i32, i32) {
    %c0_i32 = arith.constant 0 : i32
    %c0_i32_0 = arith.constant 0 : i32
    %c0_i32_1 = arith.constant 0 : i32
    %c0_i32_2 = arith.constant 0 : i32
    return %c0_i32, %c0_i32_0, %c0_i32_1 : i32, i32, i32
  }
  func.func @transform_4(%arg0: i32, %arg1: i32, %arg2: i32) -> (i32, i32) {
    %c0_i32 = arith.constant 0 : i32
    %c0_i32_0 = arith.constant 0 : i32
    %c0_i32_1 = arith.constant 0 : i32
    return %c0_i32, %c0_i32_0 : i32, i32
  }
  func.func @transform_5(%arg0: i32, %arg1: i32, %arg2: i32) -> (i32, i32, i32) {
    %c0_i32 = arith.constant 0 : i32
    %c0_i32_0 = arith.constant 0 : i32
    return %arg0, %arg1, %c0_i32 : i32, i32, i32
  }
}

</mosaic_0001>

<llo_original>
// kernel: tpu_custom_call.1
$region0: #{tpu_custom_call.1}
  #allocation0 [shape = 'u32[]', space=smem, size = 0x4, offset = 0x4, fixed_abs, tag = 'smem constant byte address 0x4 - core index']
  #allocation1 [shape = 'u32[72,128]{1,0:T(1,128)}', space=vmem, size = 0x9000, scoped, tag = 'internal scratch']
  #allocation2 [shape = 'f32[4,8,1]{2,1,0:T(8,128)}', space=vmem, size = 0x4000, scoped, tag = 'scratch operand']
  #allocation3 [shape = 'f32[4,8,1]{2,1,0:T(8,128)}', space=vmem, size = 0x4000, scoped, tag = 'scratch operand']
  #allocation4 [shape = 'f32[4,8,8]{2,1,0:T(8,128)}', space=vmem, size = 0x4000, scoped, tag = 'scratch operand']
  %s0 = inlined_call_operand.vmem [shape: bf16[2,4,8,8], index: 0, kind: input, shape index: {}]
  %s1 = inlined_call_operand.vmem [shape: bf16[2,4,16,8], index: 1, kind: input, shape index: {}]
  %s2 = inlined_call_operand.vmem [shape: bf16[2,4,16,8], index: 2, kind: input, shape index: {}]
  %s3 = inlined_call_operand.vmem [shape: bf16[4,8,32], index: 3, kind: input, shape index: {}]
  %s4 = inlined_call_operand.vmem [shape: f32[1,32], index: 4, kind: input, shape index: {}]
  %s5 = inlined_call_operand.hbm [shape: f32[2,8,32], index: 5, kind: output, shape index: {}]
  %s6 = sld [smem:[#allocation0]]
  $region61: #{tpu_custom_call.1} parent=0
    _
  %s8 = ssub.s32 1, %s6
  %s9 = scalar_select 0, %s8, %s6
  $region1: #{tpu_custom_call.1} parent=0
    #allocation5 [shape = 'u8[8192]{0}', space=vmem, size = 0x2000, scoped, tag = 'output window, operand 0']
    #allocation6 [shape = 's32[2]{0}', space=sflag, size = 0x8, scoped, tag = 'scoped memory for tpu_custom_call.1']
    %10 = vsyncpa [#allocation6], 0
    %s11 = scalar_lea.sflag [#allocation6], 1
    %12 = vsyncpa %s11, 0
    loop: start=0, step=1, limit=4
    $region2: #{tpu_custom_call.1} parent=1 // loop_pre_header
      _
    $region3: #{tpu_custom_call.1} parent=1 // loop_header
      %s14 = sphi 0, %s18
      %p15 = scmp.ge.s32.totalorder %s14, 4
      %s21 = sphi 0, %s40
      %s22 = sphi 0, %s36
      %s23 = sphi 0, %s32
      %s24 = sphi 0, %s21
      %s25 = sphi 0, %s22
      %s26 = sphi 0, %s23
      %s27 = sphi 0, %s24
      %s28 = sphi 0, %s25
      %s29 = sphi 0, %s26
      %s45 = sphi 0, %s47
      %s48 = sphi 0, %s45
      %s49 = sphi 0, %s48
      %s65 = sphi 0, %s49
      %s73 = sphi 0, %s75
      %s76 = sphi 0, %s73
      %s77 = sphi 0, %s76
      %s93 = sphi 0, %s77
      %s101 = sphi 0, %s103
      %s104 = sphi 0, %s101
      %s105 = sphi 0, %s104
      %s121 = sphi 0, %s105
      %s125 = sphi 0, %s125
      %s127 = sphi 0, %s125
      %s128 = sphi 0, %s127
      %s142 = sphi 0, %s128
      %s146 = sphi 0, %s146
      %s148 = sphi 0, %s146
      %s149 = sphi 0, %s148
      %s163 = sphi 0, %s149
      %s171 = sphi 0, %s173
      %s174 = sphi 0, %s171
      %s175 = sphi 0, %s174
      %s191 = sphi 0, %s175
    $region4: #{tpu_custom_call.1} parent=1 // loop_header_branch
      %17 = sbr.rel (%p15) target = $region8
    $region5: #{tpu_custom_call.1} parent=1 // loop_body
      %s19 = ssub.s32 %s14, 1
      %s20 = ssub.s32 %s14, 2
      %s30 = sadd.s32 1, %s23
      %p31 = scmp.ge.s32.totalorder %s30, 1
      %s32 = scalar_select %p31, 0, %s30
      %s33 = sadd.s32 1, %s22
      %s34 = scalar_select %p31, %s33, %s22
      %p35 = scmp.ge.s32.totalorder %s34, 1
      %s36 = scalar_select %p35, 0, %s34
      %s37 = sadd.s32 1, %s21
      %s38 = scalar_select %p35, %s37, %s21
      %p39 = scmp.ge.s32.totalorder %s38, 2
      %s40 = scalar_select %p39, 0, %s38
      %s41 = ssub.s32 %s21, %s40
      %s42 = ssub.s32 %s22, %s36
      %s43 = sor.u32 %s41, %s42
      %p44 = scmp.eq.s32.totalorder %s43, 0
      %s46 = sadd.s32 %s45, 1
      %s47 = scalar_select %p44, %s45, %s46
      %p50 = pneg %p44
      %p51 = scmp.eq.s32.totalorder %s14, 1
      %p52 = por %p50, %p51
      %p53 = scmp.ne.s32.totalorder %s45, %s48
      %p54 = scmp.eq.s32.totalorder %s14, 0
      %p55 = por %p53, %p54
      %p56 = scmp.ne.s32.totalorder %s45, %s48
      %p57 = scmp.eq.s32.totalorder %s19, 1
      %p58 = por %p56, %p57
      %p59 = scmp.ne.s32.totalorder %s48, %s49
      %p60 = scmp.eq.s32.totalorder %s19, 0
      %p61 = por %p59, %p60
      %p62 = scmp.ne.s32.totalorder %s48, %s49
      %p63 = scmp.eq.s32.totalorder %s20, 1
      %p64 = por %p62, %p63
      %p66 = scmp.ne.s32.totalorder %s49, %s65
      %p67 = scmp.eq.s32.totalorder %s20, 0
      %p68 = por %p66, %p67
      %s69 = ssub.s32 %s21, %s40
      %s70 = ssub.s32 %s23, %s32
      %s71 = sor.u32 %s69, %s70
      %p72 = scmp.eq.s32.totalorder %s71, 0
      %s74 = sadd.s32 %s73, 1
      %s75 = scalar_select %p72, %s73, %s74
      %p78 = pneg %p72
      %p79 = scmp.eq.s32.totalorder %s14, 1
      %p80 = por %p78, %p79
      %p81 = scmp.ne.s32.totalorder %s73, %s76
      %p82 = scmp.eq.s32.totalorder %s14, 0
      %p83 = por %p81, %p82
      %p84 = scmp.ne.s32.totalorder %s73, %s76
      %p85 = scmp.eq.s32.totalorder %s19, 1
      %p86 = por %p84, %p85
      %p87 = scmp.ne.s32.totalorder %s76, %s77
      %p88 = scmp.eq.s32.totalorder %s19, 0
      %p89 = por %p87, %p88
      %p90 = scmp.ne.s32.totalorder %s76, %s77
      %p91 = scmp.eq.s32.totalorder %s20, 1
      %p92 = por %p90, %p91
      %p94 = scmp.ne.s32.totalorder %s77, %s93
      %p95 = scmp.eq.s32.totalorder %s20, 0
      %p96 = por %p94, %p95
      %s97 = ssub.s32 %s21, %s40
      %s98 = ssub.s32 %s23, %s32
      %s99 = sor.u32 %s97, %s98
      %p100 = scmp.eq.s32.totalorder %s99, 0
      %s102 = sadd.s32 %s101, 1
      %s103 = scalar_select %p100, %s101, %s102
      %p106 = pneg %p100
      %p107 = scmp.eq.s32.totalorder %s14, 1
      %p108 = por %p106, %p107
      %p109 = scmp.ne.s32.totalorder %s101, %s104
      %p110 = scmp.eq.s32.totalorder %s14, 0
      %p111 = por %p109, %p110
      %p112 = scmp.ne.s32.totalorder %s101, %s104
      %p113 = scmp.eq.s32.totalorder %s19, 1
      %p114 = por %p112, %p113
      %p115 = scmp.ne.s32.totalorder %s104, %s105
      %p116 = scmp.eq.s32.totalorder %s19, 0
      %p117 = por %p115, %p116
      %p118 = scmp.ne.s32.totalorder %s104, %s105
      %p119 = scmp.eq.s32.totalorder %s20, 1
      %p120 = por %p118, %p119
      %p122 = scmp.ne.s32.totalorder %s105, %s121
      %p123 = scmp.eq.s32.totalorder %s20, 0
      %p124 = por %p122, %p123
      %s126 = sadd.s32 %s125, 1
      %p129 = scmp.eq.s32.totalorder %s14, 1
      %p130 = scmp.ne.s32.totalorder %s125, %s127
      %p131 = scmp.eq.s32.totalorder %s14, 0
      %p132 = por %p130, %p131
      %p133 = scmp.ne.s32.totalorder %s125, %s127
      %p134 = scmp.eq.s32.totalorder %s19, 1
      %p135 = por %p133, %p134
      %p136 = scmp.ne.s32.totalorder %s127, %s128
      %p137 = scmp.eq.s32.totalorder %s19, 0
      %p138 = por %p136, %p137
      %p139 = scmp.ne.s32.totalorder %s127, %s128
      %p140 = scmp.eq.s32.totalorder %s20, 1
      %p141 = por %p139, %p140
      %p143 = scmp.ne.s32.totalorder %s128, %s142
      %p144 = scmp.eq.s32.totalorder %s20, 0
      %p145 = por %p143, %p144
      %s147 = sadd.s32 %s146, 1
      %p150 = scmp.eq.s32.totalorder %s14, 1
      %p151 = scmp.ne.s32.totalorder %s146, %s148
      %p152 = scmp.eq.s32.totalorder %s14, 0
      %p153 = por %p151, %p152
      %p154 = scmp.ne.s32.totalorder %s146, %s148
      %p155 = scmp.eq.s32.totalorder %s19, 1
      %p156 = por %p154, %p155
      %p157 = scmp.ne.s32.totalorder %s148, %s149
      %p158 = scmp.eq.s32.totalorder %s19, 0
      %p159 = por %p157, %p158
      %p160 = scmp.ne.s32.totalorder %s148, %s149
      %p161 = scmp.eq.s32.totalorder %s20, 1
      %p162 = por %p160, %p161
      %p164 = scmp.ne.s32.totalorder %s149, %s163
      %p165 = scmp.eq.s32.totalorder %s20, 0
      %p166 = por %p164, %p165
      %s167 = ssub.s32 %s21, %s40
      %s168 = ssub.s32 %s22, %s36
      %s169 = sor.u32 %s167, %s168
      %p170 = scmp.eq.s32.totalorder %s169, 0
      %s172 = sadd.s32 %s171, 1
      %s173 = scalar_select %p170, %s171, %s172
      %p176 = pneg %p170
      %p177 = scmp.eq.s32.totalorder %s14, 1
      %p178 = por %p176, %p177
      %p179 = scmp.ne.s32.totalorder %s171, %s174
      %p180 = scmp.eq.s32.totalorder %s14, 0
      %p181 = por %p179, %p180
      %p182 = scmp.ne.s32.totalorder %s171, %s174
      %p183 = scmp.eq.s32.totalorder %s19, 1
      %p184 = por %p182, %p183
      %p185 = scmp.ne.s32.totalorder %s174, %s175
      %p186 = scmp.eq.s32.totalorder %s19, 0
      %p187 = por %p185, %p186
      %p188 = scmp.ne.s32.totalorder %s174, %s175
      %p189 = scmp.eq.s32.totalorder %s20, 1
      %p190 = por %p188, %p189
      %p192 = scmp.ne.s32.totalorder %s175, %s191
      %p193 = scmp.eq.s32.totalorder %s20, 0
      %p194 = por %p192, %p193
      %p195 = scmp.le.s32.totalorder 1, %s14
      %p196 = scmp.lt.s32.totalorder %s14, 3
      %p197 = pnand %p195, %p196
      %p198 = pneg %p197
      // Predicated region
      $region9: #{tpu_custom_call.1} parent=5 // pred_check
        _
      $region10: #{tpu_custom_call.1} parent=5 // pred_check_branch
        %200 = sbr.rel (%p197) target = $region12
      $region11: #{tpu_custom_call.1} parent=5 // pred_region
        %s201 = ssub.s32 %s14, 1
        // Predicated region
        $region13: #{tpu_custom_call.1} parent=11 // pred_check
          %p202 = pneg %p138
        $region14: #{tpu_custom_call.1} parent=11 // pred_check_branch
          %204 = sbr.rel (%p202) target = $region16
        $region15: #{tpu_custom_call.1} parent=11 // pred_region
          _
        $region16: #{tpu_custom_call.1} parent=11 // pred_fallthru
          _
        // Predicated region
        $region17: #{tpu_custom_call.1} parent=11 // pred_check
          %p205 = pneg %p159
        $region18: #{tpu_custom_call.1} parent=11 // pred_check_branch
          %207 = sbr.rel (%p205) target = $region20
        $region19: #{tpu_custom_call.1} parent=11 // pred_region
          _
        $region20: #{tpu_custom_call.1} parent=11 // pred_fallthru
          _
      $region12: #{tpu_custom_call.1} parent=5 // pred_fallthru
        _
      %p208 = scmp.lt.s32.totalorder %s14, 2
      // Predicated region
      $region21: #{tpu_custom_call.1} parent=5 // pred_check
        %p209 = pneg %p208
      $region22: #{tpu_custom_call.1} parent=5 // pred_check_branch
        %211 = sbr.rel (%p209) target = $region24
      $region23: #{tpu_custom_call.1} parent=5 // pred_region
        // Predicated region
        $region25: #{tpu_custom_call.1} parent=23 // pred_check
          %p212 = pneg %p55
        $region26: #{tpu_custom_call.1} parent=23 // pred_check_branch
          %214 = sbr.rel (%p212) target = $region28
        $region27: #{tpu_custom_call.1} parent=23 // pred_region
          %p215 = scmp.lt.s32.totalorder %s21, 1
          %s216 = scalar_select %p215, %s21, 1
          %p217 = scmp.lt.s32.totalorder %s22, 0
          %s218 = scalar_select %p217, %s22, 0
          %s219 = smul.addr %s216, 4
          %s220 = sadd.s32 %s218, %s219
          %s221 = smul.addr %s220, 4
          %s222 = scalar_lea.vmem %s0, %s221
        $region28: #{tpu_custom_call.1} parent=23 // pred_fallthru
          _
        // Predicated region
        $region29: #{tpu_custom_call.1} parent=23 // pred_check
          %p223 = pneg %p83
        $region30: #{tpu_custom_call.1} parent=23 // pred_check_branch
          %225 = sbr.rel (%p223) target = $region32
        $region31: #{tpu_custom_call.1} parent=23 // pred_region
          %s226 = smul.u32 2, %s23
          %p227 = scmp.lt.s32.totalorder %s21, 1
          %s228 = scalar_select %p227, %s21, 1
          %p229 = scmp.lt.s32.totalorder %s226, 1
          %s230 = scalar_select %p229, %s226, 1
          %s231 = smul.addr %s228, 8
          %s232 = sadd.s32 %s230, %s231
          %s233 = smul.addr %s232, 4
          %s234 = scalar_lea.vmem %s1, %s233
          %s235 = smul.u32 2, %s23
        $region32: #{tpu_custom_call.1} parent=23 // pred_fallthru
          _
        // Predicated region
        $region33: #{tpu_custom_call.1} parent=23 // pred_check
          %p236 = pneg %p111
        $region34: #{tpu_custom_call.1} parent=23 // pred_check_branch
          %238 = sbr.rel (%p236) target = $region36
        $region35: #{tpu_custom_call.1} parent=23 // pred_region
          %s239 = smul.u32 2, %s23
          %p240 = scmp.lt.s32.totalorder %s21, 1
          %s241 = scalar_select %p240, %s21, 1
          %p242 = scmp.lt.s32.totalorder %s239, 1
          %s243 = scalar_select %p242, %s239, 1
          %s244 = smul.addr %s241, 8
          %s245 = sadd.s32 %s243, %s244
          %s246 = smul.addr %s245, 4
          %s247 = scalar_lea.vmem %s2, %s246
          %s248 = smul.u32 2, %s23
        $region36: #{tpu_custom_call.1} parent=23 // pred_fallthru
          _
      $region24: #{tpu_custom_call.1} parent=5 // pred_fallthru
        _
      %p249 = scmp.le.s32.totalorder 1, %s14
      %p250 = scmp.lt.s32.totalorder %s14, 3
      %p251 = pnand %p249, %p250
      %p252 = pneg %p251
      // Predicated region
      $region37: #{tpu_custom_call.1} parent=5 // pred_check
        _
      $region38: #{tpu_custom_call.1} parent=5 // pred_check_branch
        %254 = sbr.rel (%p251) target = $region40
      $region39: #{tpu_custom_call.1} parent=5 // pred_region
        %s255 = ssub.s32 %s14, 1
        %p256 = scmp.lt.s32.totalorder %s24, 1
        %s257 = scalar_select %p256, %s24, 1
        %p258 = scmp.lt.s32.totalorder %s25, 0
        %s259 = scalar_select %p258, %s25, 0
        %s260 = smul.addr %s257, 4
        %s261 = sadd.s32 %s259, %s260
        %s262 = smul.addr %s261, 4
        %s263 = scalar_lea.vmem %s0, %s262
        %p264 = pneg %p61
        %p265 = pneg %p58
        %s266 = smul.u32 2, %s26
        %p267 = scmp.lt.s32.totalorder %s24, 1
        %s268 = scalar_select %p267, %s24, 1
        %p269 = scmp.lt.s32.totalorder %s266, 1
        %s270 = scalar_select %p269, %s266, 1
        %s271 = smul.addr %s268, 8
        %s272 = sadd.s32 %s270, %s271
        %s273 = smul.addr %s272, 4
        %s274 = scalar_lea.vmem %s1, %s273
        %p275 = pneg %p89
        %p276 = pneg %p86
        %s277 = smul.u32 2, %s26
        %p278 = scmp.lt.s32.totalorder %s24, 1
        %s279 = scalar_select %p278, %s24, 1
        %p280 = scmp.lt.s32.totalorder %s277, 1
        %s281 = scalar_select %p280, %s277, 1
        %s282 = smul.addr %s279, 8
        %s283 = sadd.s32 %s281, %s282
        %s284 = smul.addr %s283, 4
        %s285 = scalar_lea.vmem %s2, %s284
        %p286 = pneg %p117
        %p287 = pneg %p114
        %p288 = pneg %p138
        %p289 = pneg %p135
        %p290 = pneg %p159
        %p291 = pneg %p156
        %p292 = pneg %p187
        %p293 = pneg %p184
        %s294 = sand.u32 %s174, 1
        %s295 = scalar_lea.sflag [#allocation6], %s294
        %s296 = sand.u32 %s174, 1
        %s297 = smul.addr %s296, 8
        %s298 = scalar_lea.vmem [#allocation5], %s297
        %p299 = scmp.lt.s32.totalorder %s24, 1
        %s300 = scalar_select %p299, %s24, 1
        %p301 = scmp.lt.s32.totalorder %s25, 0
        %s302 = scalar_select %p301, %s25, 0
        %s303 = smul.addr %s300, 4
        %s304 = sadd.s32 %s302, %s303
        %s305 = smul.addr %s304, 4
        %s306 = scalar_lea.vmem %s0, %s305
        %s307 = smul.u32 2, %s26
        %p308 = scmp.lt.s32.totalorder %s24, 1
        %s309 = scalar_select %p308, %s24, 1
        %p310 = scmp.lt.s32.totalorder %s307, 1
        %s311 = scalar_select %p310, %s307, 1
        %s312 = smul.addr %s309, 8
        %s313 = sadd.s32 %s311, %s312
        %s314 = smul.addr %s313, 4
        %s315 = scalar_lea.vmem %s1, %s314
        %s316 = smul.u32 2, %s26
        %s317 = smul.u32 2, %s26
        %p318 = scmp.lt.s32.totalorder %s24, 1
        %s319 = scalar_select %p318, %s24, 1
        %p320 = scmp.lt.s32.totalorder %s317, 1
        %s321 = scalar_select %p320, %s317, 1
        %s322 = smul.addr %s319, 8
        %s323 = sadd.s32 %s321, %s322
        %s324 = smul.addr %s323, 4
        %s325 = scalar_lea.vmem %s2, %s324
        %s326 = smul.u32 2, %s26
        %p328 = scmp.eq.s32.totalorder %s26, 0
        // Predicated region
        $region41: #{tpu_custom_call.1} parent=39 // pred_check
          %p329 = pneg %p328
        $region42: #{tpu_custom_call.1} parent=39 // pred_check_branch
          %331 = sbr.rel (%p329) target = $region44
        $region43: #{tpu_custom_call.1} parent=39 // pred_region
          %vm332 = vcmask 7168
          %333 = vst.msk [vmem:[#allocation2] sm:$0xff] %vm332, -inf
          %334 = vst.msk [vmem:[#allocation2 + $0x8] sm:$0xff] %vm332, -inf
          %335 = vst.msk [vmem:[#allocation2 + $0x10] sm:$0xff] %vm332, -inf
          %336 = vst.msk [vmem:[#allocation2 + $0x18] sm:$0xff] %vm332, -inf
          %337 = vst.msk [vmem:[#allocation3] sm:$0xff] %vm332, 0.0
          %338 = vst.msk [vmem:[#allocation3 + $0x8] sm:$0xff] %vm332, 0.0
          %339 = vst.msk [vmem:[#allocation3 + $0x10] sm:$0xff] %vm332, 0.0
          %340 = vst.msk [vmem:[#allocation3 + $0x18] sm:$0xff] %vm332, 0.0
          %vm341 = vcmask 64512
          %342 = vst.msk [vmem:[#allocation4] sm:$0xff] %vm341, 0.0
          %343 = vst.msk [vmem:[#allocation4 + $0x8] sm:$0xff] %vm341, 0.0
          %344 = vst.msk [vmem:[#allocation4 + $0x10] sm:$0xff] %vm341, 0.0
          %345 = vst.msk [vmem:[#allocation4 + $0x18] sm:$0xff] %vm341, 0.0
        $region44: #{tpu_custom_call.1} parent=39 // pred_fallthru
          _
        %v346 = vld [vmem:[%s306] sm:$0xf]
        %v347 = vld [vmem:[%s306 + $0x4] sm:$0xf]
        %v348 = vld [vmem:[%s306 + $0x8] sm:$0xf]
        %v349 = vld [vmem:[%s306 + $0xc] sm:$0xf]
        %v350 = vld [vmem:[%s315] sm:$0xf]
        %v351 = vld [vmem:[%s315 + $0x4] sm:$0xf]
        %v352 = vld [vmem:[%s315 + $0x8] sm:$0xf]
        %v353 = vld [vmem:[%s315 + $0xc] sm:$0xf]
        %v354 = vld [vmem:[%s315 + $0x10] sm:$0xf]
        %v355 = vld [vmem:[%s315 + $0x14] sm:$0xf]
        %v356 = vld [vmem:[%s315 + $0x18] sm:$0xf]
        %v357 = vld [vmem:[%s315 + $0x1c] sm:$0xf]
        %v358 = vld [vmem:[%s325] sm:$0xf]
        %v359 = vld [vmem:[%s325 + $0x4] sm:$0xf]
        %v360 = vld [vmem:[%s325 + $0x8] sm:$0xf]
        %v361 = vld [vmem:[%s325 + $0xc] sm:$0xf]
        %v362 = vld [vmem:[%s325 + $0x10] sm:$0xf]
        %v363 = vld [vmem:[%s325 + $0x14] sm:$0xf]
        %v364 = vld [vmem:[%s325 + $0x18] sm:$0xf]
        %v365 = vld [vmem:[%s325 + $0x1c] sm:$0xf]
        %v368 = vunpack.c.l.b16 %v350
        %v369 = vunpack.c.l.b16 %v351
        %v370 = vpack.c.b16 %v369, %v368
        %vm371 = vcmask 64512
        %v373 = vsel %vm371, %v346, 0
        %v376 = vsel %vm371, %v370, 0
        %378 = vmatpush.bf16.xpose.msra.mxu0 0
        %379 = vmatpush.bf16.xpose.msra.mxu0 0
        %380 = vmatpush.bf16.xpose.msra.mxu0 0
        %381 = vmatpush.bf16.xpose.msra.mxu0 0
        %382 = vmatpush.bf16.xpose.msra.mxu0 0
        %383 = vmatpush.bf16.xpose.msra.mxu0 0
        %384 = vmatpush.bf16.xpose.msra.mxu0 0
        %385 = vmatpush.bf16.xpose.msra.mxu0 %v376
        %386 = vmatmul.bf16.gmra.mxu0 %v373
        %v387 = vpop.f32.mrf.mxu0
        %v388 = vadd.f32 0.0, %v387
        %v389 = vpop.f32.mrf.mxu0
        %390 = vdwg.mxu0
        %v393 = vunpack.c.l.b16 %v352
        %v394 = vunpack.c.l.b16 %v353
        %v395 = vpack.c.b16 %v394, %v393
        %v397 = vsel %vm371, %v347, 0
        %v400 = vsel %vm371, %v395, 0
        %402 = vmatpush.bf16.xpose.msra.mxu0 0
        %403 = vmatpush.bf16.xpose.msra.mxu0 0
        %404 = vmatpush.bf16.xpose.msra.mxu0 0
        %405 = vmatpush.bf16.xpose.msra.mxu0 0
        %406 = vmatpush.bf16.xpose.msra.mxu0 0
        %407 = vmatpush.bf16.xpose.msra.mxu0 0
        %408 = vmatpush.bf16.xpose.msra.mxu0 0
        %409 = vmatpush.bf16.xpose.msra.mxu0 %v400
        %410 = vmatmul.bf16.gmra.mxu0 %v397
        %v411 = vpop.f32.mrf.mxu0
        %v412 = vadd.f32 0.0, %v411
        %v413 = vpop.f32.mrf.mxu0
        %414 = vdwg.mxu0
        %v417 = vunpack.c.l.b16 %v354
        %v418 = vunpack.c.l.b16 %v355
        %v419 = vpack.c.b16 %v418, %v417
        %v421 = vsel %vm371, %v348, 0
        %v424 = vsel %vm371, %v419, 0
        %426 = vmatpush.bf16.xpose.msra.mxu0 0
        %427 = vmatpush.bf16.xpose.msra.mxu0 0
        %428 = vmatpush.bf16.xpose.msra.mxu0 0
        %429 = vmatpush.bf16.xpose.msra.mxu0 0
        %430 = vmatpush.bf16.xpose.msra.mxu0 0
        %431 = vmatpush.bf16.xpose.msra.mxu0 0
        %432 = vmatpush.bf16.xpose.msra.mxu0 0
        %433 = vmatpush.bf16.xpose.msra.mxu0 %v424
        %434 = vmatmul.bf16.gmra.mxu0 %v421
        %v435 = vpop.f32.mrf.mxu0
        %v436 = vadd.f32 0.0, %v435
        %v437 = vpop.f32.mrf.mxu0
        %438 = vdwg.mxu0
        %v441 = vunpack.c.l.b16 %v356
        %v442 = vunpack.c.l.b16 %v357
        %v443 = vpack.c.b16 %v442, %v441
        %v445 = vsel %vm371, %v349, 0
        %v448 = vsel %vm371, %v443, 0
        %450 = vmatpush.bf16.xpose.msra.mxu0 0
        %451 = vmatpush.bf16.xpose.msra.mxu0 0
        %452 = vmatpush.bf16.xpose.msra.mxu0 0
        %453 = vmatpush.bf16.xpose.msra.mxu0 0
        %454 = vmatpush.bf16.xpose.msra.mxu0 0
        %455 = vmatpush.bf16.xpose.msra.mxu0 0
        %456 = vmatpush.bf16.xpose.msra.mxu0 0
        %457 = vmatpush.bf16.xpose.msra.mxu0 %v448
        %458 = vmatmul.bf16.gmra.mxu0 %v445
        %v459 = vpop.f32.mrf.mxu0
        %v460 = vadd.f32 0.0, %v459
        %v461 = vpop.f32.mrf.mxu0
        %462 = vdwg.mxu0
        %v463 = vld [vmem:[#allocation2] sm:$0xff]
        %v464 = vld [vmem:[#allocation2 + $0x8] sm:$0xff]
        %v465 = vld [vmem:[#allocation2 + $0x10] sm:$0xff]
        %v466 = vld [vmem:[#allocation2 + $0x18] sm:$0xff]
        %vm467 = vcmask 130048
        %v468 = vsel %vm467, %v388, -inf
        %469 = vmax.xlane.f32.xlu0 %v468
        %v470 = vpop.xlane.xlu0 %469
        %v471 = vsel %vm467, %v412, -inf
        %472 = vmax.xlane.f32.xlu0 %v471
        %v473 = vpop.xlane.xlu0 %472
        %v474 = vsel %vm467, %v436, -inf
        %475 = vmax.xlane.f32.xlu0 %v474
        %v476 = vpop.xlane.xlu0 %475
        %v477 = vsel %vm467, %v460, -inf
        %478 = vmax.xlane.f32.xlu0 %v477
        %v479 = vpop.xlane.xlu0 %478
        %v480 = vmax.f32 %v463, %v470
        %v481 = vmax.f32 %v464, %v473
        %v482 = vmax.f32 %v465, %v476
        %v483 = vmax.f32 %v466, %v479
        %v484 = vsub.f32 %v463, %v480
        %v485 = vsub.f32 %v464, %v481
        %v486 = vsub.f32 %v465, %v482
        %v487 = vsub.f32 %v466, %v483
        %v488 = vmul.f32 %v484, 1.442695
        %v489 = vpow.pop %v488
        %v490 = vmul.f32 %v485, 1.442695
        %v491 = vpow.pop %v490
        %v492 = vmul.f32 %v486, 1.442695
        %v493 = vpow.pop %v492
        %v494 = vmul.f32 %v487, 1.442695
        %v495 = vpow.pop %v494
        %497 = vset.pattern.permute.xlu0 0
        %498 = vperm.xlu0 %497, %v480
        %v499 = vpop.permute.xlu0 %498
        %502 = vset.pattern.permute.xlu0 0
        %503 = vperm.xlu0 %502, %v481
        %v504 = vpop.permute.xlu0 %503
        %507 = vset.pattern.permute.xlu0 0
        %508 = vperm.xlu0 %507, %v482
        %v509 = vpop.permute.xlu0 %508
        %512 = vset.pattern.permute.xlu0 0
        %513 = vperm.xlu0 %512, %v483
        %v514 = vpop.permute.xlu0 %513
        %v516 = vsub.f32 %v388, %v499
        %v517 = vsub.f32 %v412, %v504
        %v518 = vsub.f32 %v436, %v509
        %v519 = vsub.f32 %v460, %v514
        %v520 = vmul.f32 %v516, 1.442695
        %v521 = vpow.pop %v520
        %v522 = vmul.f32 %v517, 1.442695
        %v523 = vpow.pop %v522
        %v524 = vmul.f32 %v518, 1.442695
        %v525 = vpow.pop %v524
        %v526 = vmul.f32 %v519, 1.442695
        %v527 = vpow.pop %v526
        %v528 = vld [vmem:[#allocation3] sm:$0xff]
        %v529 = vld [vmem:[#allocation3 + $0x8] sm:$0xff]
        %v530 = vld [vmem:[#allocation3 + $0x10] sm:$0xff]
        %v531 = vld [vmem:[#allocation3 + $0x18] sm:$0xff]
        %v532 = vmul.f32 %v489, %v528
        %v533 = vmul.f32 %v491, %v529
        %v534 = vmul.f32 %v493, %v530
        %v535 = vmul.f32 %v495, %v531
        %v536 = vsel %vm467, %v521, 0.0
        %537 = vadd.xlane.f32.xlu0 %v536
        %v538 = vpop.xlane.xlu0 %537
        %v539 = vsel %vm467, %v523, 0.0
        %540 = vadd.xlane.f32.xlu0 %v539
        %v541 = vpop.xlane.xlu0 %540
        %v542 = vsel %vm467, %v525, 0.0
        %543 = vadd.xlane.f32.xlu0 %v542
        %v544 = vpop.xlane.xlu0 %543
        %v545 = vsel %vm467, %v527, 0.0
        %546 = vadd.xlane.f32.xlu0 %v545
        %v547 = vpop.xlane.xlu0 %546
        %v548 = vadd.f32 %v532, %v538
        %v549 = vadd.f32 %v533, %v541
        %v550 = vadd.f32 %v534, %v544
        %v551 = vadd.f32 %v535, %v547
        %vm552 = vcmask 7168
        %553 = vst.msk [vmem:[#allocation3] sm:$0xff] %vm552, %v548
        %554 = vst.msk [vmem:[#allocation3 + $0x8] sm:$0xff] %vm552, %v549
        %555 = vst.msk [vmem:[#allocation3 + $0x10] sm:$0xff] %vm552, %v550
        %556 = vst.msk [vmem:[#allocation3 + $0x18] sm:$0xff] %vm552, %v551
        %v557 = vld [vmem:[#allocation4] sm:$0xff]
        %v558 = vld [vmem:[#allocation4 + $0x8] sm:$0xff]
        %v559 = vld [vmem:[#allocation4 + $0x10] sm:$0xff]
        %v560 = vld [vmem:[#allocation4 + $0x18] sm:$0xff]
        %562 = vset.pattern.permute.xlu0 0
        %563 = vperm.xlu0 %562, %v489
        %v564 = vpop.permute.xlu0 %563
        %567 = vset.pattern.permute.xlu0 0
        %568 = vperm.xlu0 %567, %v491
        %v569 = vpop.permute.xlu0 %568
        %572 = vset.pattern.permute.xlu0 0
        %573 = vperm.xlu0 %572, %v493
        %v574 = vpop.permute.xlu0 %573
        %577 = vset.pattern.permute.xlu0 0
        %578 = vperm.xlu0 %577, %v495
        %v579 = vpop.permute.xlu0 %578
        %v581 = vmul.f32 %v564, %v557
        %v582 = vmul.f32 %v569, %v558
        %v583 = vmul.f32 %v574, %v559
        %v584 = vmul.f32 %v579, %v560
        %v585 = vpack.c.bf16 %v521, %v521
        %v586 = vpack.c.bf16 %v523, %v523
        %v587 = vpack.c.bf16 %v525, %v525
        %v588 = vpack.c.bf16 %v527, %v527
        %v591 = vunpack.c.l.b16 %v358
        %v592 = vunpack.c.l.b16 %v359
        %v593 = vpack.c.b16 %v592, %v591
        %v596 = vsel %vm467, %v585, 0
        %598 = vmatpush.bf16.msra.mxu0 0
        %599 = vmatpush.bf16.msra.mxu0 0
        %600 = vmatpush.bf16.msra.mxu0 0
        %601 = vmatpush.bf16.msra.mxu0 0
        %602 = vmatpush.bf16.msra.mxu0 0
        %603 = vmatpush.bf16.msra.mxu0 0
        %604 = vmatpush.bf16.msra.mxu0 0
        %605 = vmatpush.bf16.msra.mxu0 %v593
        %606 = vmatmul.bf16.gmra.mxu0 %v596
        %v607 = vpop.f32.mrf.mxu0
        %v608 = vadd.f32 0.0, %v607
        %v609 = vpop.f32.mrf.mxu0
        %610 = vdwg.mxu0
        %v613 = vunpack.c.l.b16 %v360
        %v614 = vunpack.c.l.b16 %v361
        %v615 = vpack.c.b16 %v614, %v613
        %v618 = vsel %vm467, %v586, 0
        %620 = vmatpush.bf16.msra.mxu0 0
        %621 = vmatpush.bf16.msra.mxu0 0
        %622 = vmatpush.bf16.msra.mxu0 0
        %623 = vmatpush.bf16.msra.mxu0 0
        %624 = vmatpush.bf16.msra.mxu0 0
        %625 = vmatpush.bf16.msra.mxu0 0
        %626 = vmatpush.bf16.msra.mxu0 0
        %627 = vmatpush.bf16.msra.mxu0 %v615
        %628 = vmatmul.bf16.gmra.mxu0 %v618
        %v629 = vpop.f32.mrf.mxu0
        %v630 = vadd.f32 0.0, %v629
        %v631 = vpop.f32.mrf.mxu0
        %632 = vdwg.mxu0
        %v635 = vunpack.c.l.b16 %v362
        %v636 = vunpack.c.l.b16 %v363
        %v637 = vpack.c.b16 %v636, %v635
        %v640 = vsel %vm467, %v587, 0
        %642 = vmatpush.bf16.msra.mxu0 0
        %643 = vmatpush.bf16.msra.mxu0 0
        %644 = vmatpush.bf16.msra.mxu0 0
        %645 = vmatpush.bf16.msra.mxu0 0
        %646 = vmatpush.bf16.msra.mxu0 0
        %647 = vmatpush.bf16.msra.mxu0 0
        %648 = vmatpush.bf16.msra.mxu0 0
        %649 = vmatpush.bf16.msra.mxu0 %v637
        %650 = vmatmul.bf16.gmra.mxu0 %v640
        %v651 = vpop.f32.mrf.mxu0
        %v652 = vadd.f32 0.0, %v651
        %v653 = vpop.f32.mrf.mxu0
        %654 = vdwg.mxu0
        %v657 = vunpack.c.l.b16 %v364
        %v658 = vunpack.c.l.b16 %v365
        %v659 = vpack.c.b16 %v658, %v657
        %v662 = vsel %vm467, %v588, 0
        %664 = vmatpush.bf16.msra.mxu0 0
        %665 = vmatpush.bf16.msra.mxu0 0
        %666 = vmatpush.bf16.msra.mxu0 0
        %667 = vmatpush.bf16.msra.mxu0 0
        %668 = vmatpush.bf16.msra.mxu0 0
        %669 = vmatpush.bf16.msra.mxu0 0
        %670 = vmatpush.bf16.msra.mxu0 0
        %671 = vmatpush.bf16.msra.mxu0 %v659
        %672 = vmatmul.bf16.gmra.mxu0 %v662
        %v673 = vpop.f32.mrf.mxu0
        %v674 = vadd.f32 0.0, %v673
        %v675 = vpop.f32.mrf.mxu0
        %676 = vdwg.mxu0
        %v677 = vadd.f32 %v581, %v608
        %v678 = vadd.f32 %v582, %v630
        %v679 = vadd.f32 %v583, %v652
        %v680 = vadd.f32 %v584, %v674
        %681 = vst.msk [vmem:[#allocation4] sm:$0xff] %vm371, %v677
        %682 = vst.msk [vmem:[#allocation4 + $0x8] sm:$0xff] %vm371, %v678
        %683 = vst.msk [vmem:[#allocation4 + $0x10] sm:$0xff] %vm371, %v679
        %684 = vst.msk [vmem:[#allocation4 + $0x18] sm:$0xff] %vm371, %v680
        %685 = vst.msk [vmem:[#allocation2] sm:$0xff] %vm552, %v480
        %686 = vst.msk [vmem:[#allocation2 + $0x8] sm:$0xff] %vm552, %v481
        %687 = vst.msk [vmem:[#allocation2 + $0x10] sm:$0xff] %vm552, %v482
        %688 = vst.msk [vmem:[#allocation2 + $0x18] sm:$0xff] %vm552, %v483
        // Predicated region
        $region45: #{tpu_custom_call.1} parent=39 // pred_check
          %p689 = pneg %p328
        $region46: #{tpu_custom_call.1} parent=39 // pred_check_branch
          %691 = sbr.rel (%p689) target = $region48
        $region47: #{tpu_custom_call.1} parent=39 // pred_region
          %v692 = vld [vmem:[#allocation3] sm:$0xff]
          %v693 = vld [vmem:[#allocation3 + $0x8] sm:$0xff]
          %v694 = vld [vmem:[#allocation3 + $0x10] sm:$0xff]
          %v695 = vld [vmem:[#allocation3 + $0x18] sm:$0xff]
          %v696 = vrcp.pop %v692
          %v697 = vrcp.pop %v693
          %v698 = vrcp.pop %v694
          %v699 = vrcp.pop %v695
          %v700 = vld [vmem:[#allocation4] sm:$0xff]
          %v701 = vld [vmem:[#allocation4 + $0x8] sm:$0xff]
          %v702 = vld [vmem:[#allocation4 + $0x10] sm:$0xff]
          %v703 = vld [vmem:[#allocation4 + $0x18] sm:$0xff]
          %705 = vset.pattern.permute.xlu0 0
          %706 = vperm.xlu0 %705, %v696
          %v707 = vpop.permute.xlu0 %706
          %710 = vset.pattern.permute.xlu0 0
          %711 = vperm.xlu0 %710, %v697
          %v712 = vpop.permute.xlu0 %711
          %715 = vset.pattern.permute.xlu0 0
          %716 = vperm.xlu0 %715, %v698
          %v717 = vpop.permute.xlu0 %716
          %720 = vset.pattern.permute.xlu0 0
          %721 = vperm.xlu0 %720, %v699
          %v722 = vpop.permute.xlu0 %721
          %v724 = vmul.f32 %v700, %v707
          %v725 = vmul.f32 %v701, %v712
          %v726 = vmul.f32 %v702, %v717
          %v727 = vmul.f32 %v703, %v722
          %v728 = vpack.c.bf16 %v724, %v724
          %v729 = vpack.c.bf16 %v725, %v725
          %v730 = vpack.c.bf16 %v726, %v726
          %v731 = vpack.c.bf16 %v727, %v727
          %v732 = vld [vmem:[%s3] sm:$0xf]
          %s733 = scalar_lea.vmem %s3, 4
          %v734 = vld [vmem:[%s733] sm:$0xf]
          %v736 = vsel %vm371, %v729, 0
          %vm738 = vcmask 1043456
          %v740 = vsel %vm738, %v734, 0
          %742 = vmatpush.bf16.msra.mxu0 0
          %743 = vmatpush.bf16.msra.mxu0 0
          %744 = vmatpush.bf16.msra.mxu0 0
          %745 = vmatpush.bf16.msra.mxu0 0
          %746 = vmatpush.bf16.msra.mxu0 0
          %747 = vmatpush.bf16.msra.mxu0 0
          %748 = vmatpush.bf16.msra.mxu0 0
          %749 = vmatpush.bf16.msra.mxu0 %v740
          %750 = vmatmul.bf16.gmra.mxu0 %v736
          %v751 = vpop.f32.mrf.mxu0
          %v752 = vadd.f32 0.0, %v751
          %v753 = vpop.f32.mrf.mxu0
          %754 = vdwg.mxu0
          %v756 = vsel %vm371, %v728, 0
          %v759 = vsel %vm738, %v732, 0
          %761 = vmatpush.bf16.msra.mxu0 0
          %762 = vmatpush.bf16.msra.mxu0 0
          %763 = vmatpush.bf16.msra.mxu0 0
          %764 = vmatpush.bf16.msra.mxu0 0
          %765 = vmatpush.bf16.msra.mxu0 0
          %766 = vmatpush.bf16.msra.mxu0 0
          %767 = vmatpush.bf16.msra.mxu0 0
          %768 = vmatpush.bf16.msra.mxu0 %v759
          %769 = vmatmul.bf16.gmra.mxu0 %v756
          %v770 = vpop.f32.mrf.mxu0
          %v771 = vadd.f32 %v752, %v770
          %v772 = vpop.f32.mrf.mxu0
          %773 = vdwg.mxu0
          %s774 = scalar_lea.vmem %s3, 8
          %v775 = vld [vmem:[%s774] sm:$0xf]
          %v777 = vsel %vm371, %v730, 0
          %v780 = vsel %vm738, %v775, 0
          %782 = vmatpush.bf16.msra.mxu0 0
          %783 = vmatpush.bf16.msra.mxu0 0
          %784 = vmatpush.bf16.msra.mxu0 0
          %785 = vmatpush.bf16.msra.mxu0 0
          %786 = vmatpush.bf16.msra.mxu0 0
          %787 = vmatpush.bf16.msra.mxu0 0
          %788 = vmatpush.bf16.msra.mxu0 0
          %789 = vmatpush.bf16.msra.mxu0 %v780
          %790 = vmatmul.bf16.gmra.mxu0 %v777
          %v791 = vpop.f32.mrf.mxu0
          %v792 = vadd.f32 0.0, %v791
          %v793 = vpop.f32.mrf.mxu0
          %794 = vdwg.mxu0
          %v795 = vadd.f32 %v771, %v792
          %s796 = scalar_lea.vmem %s3, 12
          %v797 = vld [vmem:[%s796] sm:$0xf]
          %v799 = vsel %vm371, %v731, 0
          %v802 = vsel %vm738, %v797, 0
          %804 = vmatpush.bf16.msra.mxu0 0
          %805 = vmatpush.bf16.msra.mxu0 0
          %806 = vmatpush.bf16.msra.mxu0 0
          %807 = vmatpush.bf16.msra.mxu0 0
          %808 = vmatpush.bf16.msra.mxu0 0
          %809 = vmatpush.bf16.msra.mxu0 0
          %810 = vmatpush.bf16.msra.mxu0 0
          %811 = vmatpush.bf16.msra.mxu0 %v802
          %812 = vmatmul.bf16.gmra.mxu0 %v799
          %v813 = vpop.f32.mrf.mxu0
          %v814 = vadd.f32 0.0, %v813
          %v815 = vpop.f32.mrf.mxu0
          %816 = vdwg.mxu0
          %v817 = vadd.f32 %v795, %v814
          %v818 = vld [vmem:[%s4] sm:$0x1]
          %v820 = vperm.slane %v818, 0
          %v822 = vadd.f32 %v817, %v820
          %vm823 = vcmask 261120
          %824 = vst.msk [vmem:[%s298] sm:$0xff] %vm823, %v822
        $region48: #{tpu_custom_call.1} parent=39 // pred_fallthru
          _
        %s825 = sand.u32 %s174, 1
        %s826 = scalar_lea.sflag [#allocation6], %s825
        %s827 = sand.u32 %s174, 1
        %s828 = smul.addr %s827, 8
        %s829 = scalar_lea.vmem [#allocation5], %s828
        // Predicated region
        $region49: #{tpu_custom_call.1} parent=39 // pred_check
          %p830 = pneg %p184
        $region50: #{tpu_custom_call.1} parent=39 // pred_check_branch
          %832 = sbr.rel (%p830) target = $region52
        $region51: #{tpu_custom_call.1} parent=39 // pred_region
          %834 = vsyncadd %s826, 0
          %s835 = sadd.s32 %s25, %s24
          %s836 = smul.addr %s835, 8
          %s837 = scalar_lea.hbm %s5, %s836
          %s839 = sshll.u32 %s829, 4
          %s840 = int_to_ptr.vmem [resolvable:$true] %s839
          %s841 = sshll.u32 %s837, 4
          %s842 = int_to_ptr.hbm [resolvable:$true] %s841
          %844 = dma.vmem_to_hbm [thread:$0]  %s840, 128, %s842, %s826
        $region52: #{tpu_custom_call.1} parent=39 // pred_fallthru
          _
      $region40: #{tpu_custom_call.1} parent=5 // pred_fallthru
        _
      %p845 = scmp.le.s32.totalorder 2, %s14
      // Predicated region
      $region53: #{tpu_custom_call.1} parent=5 // pred_check
        %p846 = pneg %p845
      $region54: #{tpu_custom_call.1} parent=5 // pred_check_branch
        %848 = sbr.rel (%p846) target = $region56
      $region55: #{tpu_custom_call.1} parent=5 // pred_region
        %s849 = ssub.s32 %s14, 2
        // Predicated region
        $region57: #{tpu_custom_call.1} parent=55 // pred_check
          %p850 = pneg %p190
        $region58: #{tpu_custom_call.1} parent=55 // pred_check_branch
          %852 = sbr.rel (%p850) target = $region60
        $region59: #{tpu_custom_call.1} parent=55 // pred_region
          %s853 = sand.u32 %s175, 1
          %s854 = scalar_lea.sflag [#allocation6], %s853
          %s855 = sand.u32 %s175, 1
          %s856 = smul.addr %s855, 8
          %s857 = scalar_lea.vmem [#allocation5], %s856
          %859 = dma.done %s854, 128
        $region60: #{tpu_custom_call.1} parent=55 // pred_fallthru
          _
      $region56: #{tpu_custom_call.1} parent=5 // pred_fallthru
        _
    $region6: #{tpu_custom_call.1} parent=1 // loop_footer
      %s18 = sadd.s32 1, %s14
    $region7: #{tpu_custom_call.1} parent=1 // loop_footer_branch
      %13 = sbr.rel target = $region3
    $region8: #{tpu_custom_call.1} parent=1 // loop_exit
      _
    %860 = vsyncpa [#allocation6], 1
    %s861 = scalar_lea.sflag [#allocation6], 1
    %862 = vsyncpa %s861, 1

</llo_original>
